<compile_context>
chip_gen: v7x
topology: tpu7x:2x2x1
jax: 0.10.0
libtpu: 0.0.40
codegen_flags: <defaults>
</compile_context>

<pallas_src>
import functools

import jax
import jax.numpy as jnp
from jax.experimental import pallas as pl
from jax.experimental.pallas import tpu as pltpu

_LANE = 128
_SUBLANE = 32   # keeps int8 mask blocks on full native (32, 128) tiles


def _ceil_div(a, b):
    return -(-a // b)


def _round_up(x, m):
    return _ceil_div(x, m) * m


def _plan_tiles(hw, num_classes, batch, pred_bytes, budget_bytes=8 * 1024 * 1024):
    """Pick (rows per block R, spatial groups G, steps per group S, rows_padded).

    The VMEM budget per grid step covers the double-buffered predict + mask
    input blocks plus ~8 f32 (R, 128) in-kernel temporaries (p_max, denom,
    e_lab, e_c, the int32 mask and the validity masks).
    """
    rows = _ceil_div(hw, _LANE)
    per_row_bytes = _LANE * (2 * (num_classes * pred_bytes + 1) + 8 * 4)
    r_cap = max(_SUBLANE, (budget_bytes // per_row_bytes) // _SUBLANE * _SUBLANE)

    # Spatial groups: keep B*G >= 8 independent (b, g) output blocks so the two
    # "parallel" grid axes always feed both v7x TensorCores, even for B == 1.
    max_groups = max(1, _ceil_div(rows, _SUBLANE))
    groups = min(max(1, _ceil_div(8, batch)), max_groups)

    steps = max(1, _ceil_div(rows, groups * r_cap))
    rows_per_block = _round_up(max(1, _ceil_div(rows, groups * steps)), _SUBLANE)
    rows_padded = groups * steps * rows_per_block
    return rows_per_block, groups, steps, rows_padded


def dice_sums_kernel(predict_ref, mask_ref, inter_ref, card_ref):
    """One (b, g, s) grid step.

    predict_ref: (1, C, R, 128) logits (input dtype, converted in-kernel)
    mask_ref:    (1, 1, R, 128) int8/int32 labels; -1 marks padded pixels
    inter_ref:   (1, 1, 1, 1) f32 running sum of one_hot * softmax
    card_ref:    (1, 1, 1, 1) f32 running sum of one_hot + softmax
    """
    s = pl.program_id(2)

    @pl.when(s == 0)
    def _():
        inter_ref[...] = jnp.zeros_like(inter_ref)
        card_ref[...] = jnp.zeros_like(card_ref)

    num_classes = predict_ref.shape[1]
    m = mask_ref[0, 0].astype(jnp.int32)                   # dense (R, 128)

    # Channel max: statically unrolled, plain vreg-wise maximum over dense slabs.
    p_max = predict_ref[0, 0].astype(jnp.float32)
    for c in range(1, num_classes):
        p_max = jnp.maximum(p_max, predict_ref[0, c].astype(jnp.float32))

    # exp(p - max) per channel; the label channel is picked via where(m == c, ...)
    # so no (C, T) one-hot / iota temporary is ever built.
    denom = jnp.zeros_like(p_max)
    e_lab = jnp.zeros_like(p_max)
    for c in range(num_classes):
        e_c = jnp.exp(predict_ref[0, c].astype(jnp.float32) - p_max)
        denom = denom + e_c
        e_lab = jnp.where(m == c, e_c, e_lab)

    # Exact divide kept (one per pixel) so the result stays well inside the
    # rtol=1e-5 check; sum_c softmax == 1, so no other divides are needed.
    inter_ref[...] += jnp.sum(e_lab * (1.0 / denom))

    # cardinality: for every real pixel softmax sums to 1 and one_hot sums to 1
    # for an in-range label; padded pixels (label -1) contribute nothing.
    real = (m >= 0).astype(jnp.float32)
    in_range = jnp.logical_and(m >= 0, m < num_classes).astype(jnp.float32)
    card_ref[...] += jnp.sum(real + in_range)


@jax.jit
def dice_loss(predict, mask):
    """predict: (B, C, H, W) float logits; mask: (B, H, W) integer labels."""
    B, C, H, W = predict.shape
    hw = H * W

    if predict.dtype not in (jnp.float32, jnp.bfloat16):
        predict = predict.astype(jnp.float32)
    pred_bytes = jnp.dtype(predict.dtype).itemsize
    mask_dtype = jnp.int8 if C <= 127 else jnp.int32   # int8 => 4x less mask DMA

    rows_per_block, groups, steps, rows_padded = _plan_tiles(hw, C, B, pred_bytes)
    hw_padded = rows_padded * _LANE

    p_flat = predict.reshape(B, C, hw)
    m_flat = mask.reshape(B, 1, hw).astype(mask_dtype)
    if hw_padded != hw:
        pad = hw_padded - hw
        p_flat = jnp.pad(p_flat, ((0, 0), (0, 0), (0, pad)))
        # Sentinel label -1: padded pixels contribute nothing in-kernel.
        m_flat = jnp.pad(m_flat, ((0, 0), (0, 0), (0, pad)), constant_values=-1)

    p4 = p_flat.reshape(B, C, rows_padded, _LANE)
    m4 = m_flat.reshape(B, 1, rows_padded, _LANE)

    inter, card = pl.pallas_call(
        dice_sums_kernel,
        out_shape=(jax.ShapeDtypeStruct((B, groups, 1, 1), jnp.float32),
                   jax.ShapeDtypeStruct((B, groups, 1, 1), jnp.float32)),
        grid_spec=pltpu.PrefetchScalarGridSpec(
            num_scalar_prefetch=0,
            grid=(B, groups, steps),
            in_specs=[
                pl.BlockSpec((1, C, rows_per_block, _LANE),
                             lambda b, g, s, S=steps: (b, 0, g * S + s, 0)),
                pl.BlockSpec((1, 1, rows_per_block, _LANE),
                             lambda b, g, s, S=steps: (b, 0, g * S + s, 0)),
            ],
            out_specs=(
                pl.BlockSpec((1, 1, 1, 1), lambda b, g, s: (b, g, 0, 0)),
                pl.BlockSpec((1, 1, 1, 1), lambda b, g, s: (b, g, 0, 0)),
            ),
        ),
        compiler_params=pltpu.CompilerParams(
            # (batch, spatial-group) are independent -> megacore sharding even
            # when B == 1; the inner spatial axis is the per-block reduction.
            dimension_semantics=("parallel", "parallel", "arbitrary"),
            vmem_limit_bytes=32 * 1024 * 1024,
        ),
    )(p4, m4)

    smooth = jnp.float32(1e-07)
    interaction = jnp.sum(inter[:, :, 0, 0], axis=1)     # finish per-sample sums
    cardinality = jnp.sum(card[:, :, 0, 0], axis=1)
    dice = 2.0 * (interaction + smooth) / (cardinality + smooth)
    return 1.0 - dice.mean()


def dice_loss_ref(predict, mask):
    """Pure-JAX reference mirroring the PyTorch forward."""
    smooth = 1e-07
    B, C, H, W = predict.shape
    onehot = jax.nn.one_hot(mask, C, dtype=jnp.float32)          # (B,H,W,C)
    mask_bin = jnp.transpose(onehot, (0, 3, 1, 2)).reshape(B, -1)
    predict_bin = jax.nn.softmax(predict, axis=1).reshape(B, -1)
    interaction = jnp.sum(mask_bin * predict_bin, axis=1)
    cardinality = jnp.sum(mask_bin, axis=1) + jnp.sum(predict_bin, axis=1)
    dice = 2 * (interaction + smooth) / (cardinality + smooth)
    return 1 - dice.mean()


if __name__ == "__main__":
    B, C, H, W = 2, 4, 16, 16
    key = jax.random.PRNGKey(0)
    k_pred, k_mask = jax.random.split(key)

    predict = jax.random.normal(k_pred, (B, C, H, W), dtype=jnp.float32)
    mask = jax.random.randint(k_mask, (B, H, W), 0, C, dtype=jnp.int32)
    # F.one_hot infers num_classes = mask.max()+1; pin it to C so the PyTorch
    # semantics line up with the C-channel predict tensor.
    mask = mask.at[0, 0, 0].set(C - 1)

    loss = jax.block_until_ready(dice_loss(predict, mask))
    loss_ref = jax.block_until_ready(dice_loss_ref(predict, mask))
    assert jnp.allclose(loss, loss_ref, rtol=1e-5, atol=1e-6), (loss, loss_ref)

    print("KERNEL_OK")
</pallas_src>

<mosaic_0001>
module attributes {stable_mosaic.version = 11 : i64} {
  func.func @dice_sums_kernel(%arg0: i32, %arg1: i32, %arg2: i32, %arg3: memref<1x4x32x128xf32, #tpu.memory_space<vmem>>, %arg4: memref<1x1x32x128xi8, #tpu.memory_space<vmem>>, %arg5: memref<1x1x1x1xf32, #tpu.memory_space<vmem>>, %arg6: memref<1x1x1x1xf32, #tpu.memory_space<vmem>>) attributes {dimension_semantics = [#tpu.dimension_semantics<parallel>, #tpu.dimension_semantics<parallel>, #tpu.dimension_semantics<arbitrary>], iteration_bounds = array<i64: 2, 1, 1>, scalar_prefetch = 0 : i64, scratch_operands = 0 : i64, tpu.core_type = #tpu.core_type<tc>, window_params = [{transform_indices = @transform_0, window_bounds = array<i64: 1, 4, 32, 128>}, {transform_indices = @transform_1, window_bounds = array<i64: 1, 1, 32, 128>}, {transform_indices = @transform_2, window_bounds = array<i64: 1, 1, 1, 1>}, {transform_indices = @transform_3, window_bounds = array<i64: 1, 1, 1, 1>}]} {
    %c0_i32 = arith.constant 0 : i32
    %0 = arith.cmpi eq, %arg2, %c0_i32 : i32
    %1 = arith.extui %0 : i1 to i32
    %c0_i32_0 = arith.constant 0 : i32
    %2 = arith.cmpi ne, %1, %c0_i32_0 : i32
    scf.if %2 {
      %cst_56 = arith.constant 0.000000e+00 : f32
      %82 = vector.broadcast %cst_56 : f32 to vector<1x1x1x1xf32>
      %c0_57 = arith.constant 0 : index
      %c0_58 = arith.constant 0 : index
      %c0_59 = arith.constant 0 : index
      %c0_60 = arith.constant 0 : index
      %83 = vector.load %arg5[%c0_57, %c0_58, %c0_59, %c0_60] : memref<1x1x1x1xf32, #tpu.memory_space<vmem>>, vector<1x1x1x1xf32>
      tpu.vector_store %arg5[%c0_57, %c0_58, %c0_59, %c0_60], %82 {strides = array<i32>} : memref<1x1x1x1xf32, #tpu.memory_space<vmem>>, vector<1x1x1x1xf32>,
      %cst_61 = arith.constant 0.000000e+00 : f32
      %84 = vector.broadcast %cst_61 : f32 to vector<1x1x1x1xf32>
      %c0_62 = arith.constant 0 : index
      %c0_63 = arith.constant 0 : index
      %c0_64 = arith.constant 0 : index
      %c0_65 = arith.constant 0 : index
      %85 = vector.load %arg6[%c0_62, %c0_63, %c0_64, %c0_65] : memref<1x1x1x1xf32, #tpu.memory_space<vmem>>, vector<1x1x1x1xf32>
      tpu.vector_store %arg6[%c0_62, %c0_63, %c0_64, %c0_65], %84 {strides = array<i32>} : memref<1x1x1x1xf32, #tpu.memory_space<vmem>>, vector<1x1x1x1xf32>,
    } else {
    }
    %c0 = arith.constant 0 : index
    %c0_1 = arith.constant 0 : index
    %c0_2 = arith.constant 0 : index
    %c0_3 = arith.constant 0 : index
    %3 = vector.load %arg4[%c0, %c0_1, %c0_2, %c0_3] : memref<1x1x32x128xi8, #tpu.memory_space<vmem>>, vector<1x1x32x128xi8>
    %4 = vector.shape_cast %3 : vector<1x1x32x128xi8> to vector<32x128xi8>
    %5 = arith.extsi %4 : vector<32x128xi8> to vector<32x128xi32>
    %c0_4 = arith.constant 0 : index
    %c0_5 = arith.constant 0 : index
    %c0_6 = arith.constant 0 : index
    %c0_7 = arith.constant 0 : index
    %6 = vector.load %arg3[%c0_4, %c0_5, %c0_6, %c0_7] : memref<1x4x32x128xf32, #tpu.memory_space<vmem>>, vector<1x1x32x128xf32>
    %7 = vector.shape_cast %6 : vector<1x1x32x128xf32> to vector<32x128xf32>
    %c0_8 = arith.constant 0 : index
    %c1 = arith.constant 1 : index
    %c0_9 = arith.constant 0 : index
    %c0_10 = arith.constant 0 : index
    %8 = vector.load %arg3[%c0_8, %c1, %c0_9, %c0_10] : memref<1x4x32x128xf32, #tpu.memory_space<vmem>>, vector<1x1x32x128xf32>
    %9 = vector.shape_cast %8 : vector<1x1x32x128xf32> to vector<32x128xf32>
    %10 = arith.maximumf %7, %9 : vector<32x128xf32>
    %c0_11 = arith.constant 0 : index
    %c2 = arith.constant 2 : index
    %c0_12 = arith.constant 0 : index
    %c0_13 = arith.constant 0 : index
    %11 = vector.load %arg3[%c0_11, %c2, %c0_12, %c0_13] : memref<1x4x32x128xf32, #tpu.memory_space<vmem>>, vector<1x1x32x128xf32>
    %12 = vector.shape_cast %11 : vector<1x1x32x128xf32> to vector<32x128xf32>
    %13 = arith.maximumf %10, %12 : vector<32x128xf32>
    %c0_14 = arith.constant 0 : index
    %c3 = arith.constant 3 : index
    %c0_15 = arith.constant 0 : index
    %c0_16 = arith.constant 0 : index
    %14 = vector.load %arg3[%c0_14, %c3, %c0_15, %c0_16] : memref<1x4x32x128xf32, #tpu.memory_space<vmem>>, vector<1x1x32x128xf32>
    %15 = vector.shape_cast %14 : vector<1x1x32x128xf32> to vector<32x128xf32>
    %16 = arith.maximumf %13, %15 : vector<32x128xf32>
    %cst = arith.constant 0.000000e+00 : f32
    %17 = vector.broadcast %cst : f32 to vector<32x128xf32>
    %cst_17 = arith.constant 0.000000e+00 : f32
    %18 = vector.broadcast %cst_17 : f32 to vector<32x128xf32>
    %c0_18 = arith.constant 0 : index
    %c0_19 = arith.constant 0 : index
    %c0_20 = arith.constant 0 : index
    %c0_21 = arith.constant 0 : index
    %19 = vector.load %arg3[%c0_18, %c0_19, %c0_20, %c0_21] : memref<1x4x32x128xf32, #tpu.memory_space<vmem>>, vector<1x1x32x128xf32>
    %20 = vector.shape_cast %19 : vector<1x1x32x128xf32> to vector<32x128xf32>
    %21 = arith.subf %20, %16 : vector<32x128xf32>
    %22 = math.exp %21 : vector<32x128xf32>
    %23 = arith.addf %17, %22 : vector<32x128xf32>
    %c0_i32_22 = arith.constant 0 : i32
    %24 = vector.broadcast %c0_i32_22 : i32 to vector<32x128xi32>
    %25 = arith.cmpi eq, %5, %24 : vector<32x128xi32>
    %26 = arith.select %25, %22, %18 : vector<32x128xi1>, vector<32x128xf32>
    %c0_23 = arith.constant 0 : index
    %c1_24 = arith.constant 1 : index
    %c0_25 = arith.constant 0 : index
    %c0_26 = arith.constant 0 : index
    %27 = vector.load %arg3[%c0_23, %c1_24, %c0_25, %c0_26] : memref<1x4x32x128xf32, #tpu.memory_space<vmem>>, vector<1x1x32x128xf32>
    %28 = vector.shape_cast %27 : vector<1x1x32x128xf32> to vector<32x128xf32>
    %29 = arith.subf %28, %16 : vector<32x128xf32>
    %30 = math.exp %29 : vector<32x128xf32>
    %31 = arith.addf %23, %30 : vector<32x128xf32>
    %c1_i32 = arith.constant 1 : i32
    %32 = vector.broadcast %c1_i32 : i32 to vector<32x128xi32>
    %33 = arith.cmpi eq, %5, %32 : vector<32x128xi32>
    %34 = arith.select %33, %30, %26 : vector<32x128xi1>, vector<32x128xf32>
    %c0_27 = arith.constant 0 : index
    %c2_28 = arith.constant 2 : index
    %c0_29 = arith.constant 0 : index
    %c0_30 = arith.constant 0 : index
    %35 = vector.load %arg3[%c0_27, %c2_28, %c0_29, %c0_30] : memref<1x4x32x128xf32, #tpu.memory_space<vmem>>, vector<1x1x32x128xf32>
    %36 = vector.shape_cast %35 : vector<1x1x32x128xf32> to vector<32x128xf32>
    %37 = arith.subf %36, %16 : vector<32x128xf32>
    %38 = math.exp %37 : vector<32x128xf32>
    %39 = arith.addf %31, %38 : vector<32x128xf32>
    %c2_i32 = arith.constant 2 : i32
    %40 = vector.broadcast %c2_i32 : i32 to vector<32x128xi32>
    %41 = arith.cmpi eq, %5, %40 : vector<32x128xi32>
    %42 = arith.select %41, %38, %34 : vector<32x128xi1>, vector<32x128xf32>
    %c0_31 = arith.constant 0 : index
    %c3_32 = arith.constant 3 : index
    %c0_33 = arith.constant 0 : index
    %c0_34 = arith.constant 0 : index
    %43 = vector.load %arg3[%c0_31, %c3_32, %c0_33, %c0_34] : memref<1x4x32x128xf32, #tpu.memory_space<vmem>>, vector<1x1x32x128xf32>
    %44 = vector.shape_cast %43 : vector<1x1x32x128xf32> to vector<32x128xf32>
    %45 = arith.subf %44, %16 : vector<32x128xf32>
    %46 = math.exp %45 : vector<32x128xf32>
    %47 = arith.addf %39, %46 : vector<32x128xf32>
    %c3_i32 = arith.constant 3 : i32
    %48 = vector.broadcast %c3_i32 : i32 to vector<32x128xi32>
    %49 = arith.cmpi eq, %5, %48 : vector<32x128xi32>
    %50 = arith.select %49, %46, %42 : vector<32x128xi1>, vector<32x128xf32>
    %c0_35 = arith.constant 0 : index
    %c0_36 = arith.constant 0 : index
    %c0_37 = arith.constant 0 : index
    %c0_38 = arith.constant 0 : index
    %51 = vector.load %arg5[%c0_35, %c0_36, %c0_37, %c0_38] : memref<1x1x1x1xf32, #tpu.memory_space<vmem>>, vector<1x1x1x1xf32>
    %cst_39 = arith.constant 1.000000e+00 : f32
    %52 = vector.broadcast %cst_39 : f32 to vector<32x128xf32>
    %53 = arith.divf %52, %47 : vector<32x128xf32>
    %54 = arith.mulf %50, %53 : vector<32x128xf32>
    %55 = vector.shape_cast %54 : vector<32x128xf32> to vector<1x32x128xf32>
    %cst_40 = arith.constant dense<0.000000e+00> : vector<1xf32>
    %56 = vector.multi_reduction <add>, %55, %cst_40 [1, 2] : vector<1x32x128xf32> to vector<1xf32>
    %57 = vector.shape_cast %56 : vector<1xf32> to vector<1x1x1xf32>
    %58 = vector.extract %57[0, 0, 0] : f32 from vector<1x1x1xf32>
    %59 = vector.broadcast %58 : f32 to vector<1x1x1x1xf32>
    %60 = arith.addf %51, %59 : vector<1x1x1x1xf32>
    %c0_41 = arith.constant 0 : index
    %c0_42 = arith.constant 0 : index
    %c0_43 = arith.constant 0 : index
    %c0_44 = arith.constant 0 : index
    %61 = vector.load %arg5[%c0_41, %c0_42, %c0_43, %c0_44] : memref<1x1x1x1xf32, #tpu.memory_space<vmem>>, vector<1x1x1x1xf32>
    tpu.vector_store %arg5[%c0_41, %c0_42, %c0_43, %c0_44], %60 {strides = array<i32>} : memref<1x1x1x1xf32, #tpu.memory_space<vmem>>, vector<1x1x1x1xf32>,
    %c0_i32_45 = arith.constant 0 : i32
    %62 = vector.broadcast %c0_i32_45 : i32 to vector<32x128xi32>
    %63 = arith.cmpi sge, %5, %62 : vector<32x128xi32>
    %64 = arith.extui %63 : vector<32x128xi1> to vector<32x128xi32>
    %65 = arith.sitofp %64 : vector<32x128xi32> to vector<32x128xf32>
    %c0_i32_46 = arith.constant 0 : i32
    %66 = vector.broadcast %c0_i32_46 : i32 to vector<32x128xi32>
    %67 = arith.cmpi sge, %5, %66 : vector<32x128xi32>
    %c4_i32 = arith.constant 4 : i32
    %68 = vector.broadcast %c4_i32 : i32 to vector<32x128xi32>
    %69 = arith.cmpi slt, %5, %68 : vector<32x128xi32>
    %70 = arith.andi %67, %69 : vector<32x128xi1>
    %71 = arith.extui %70 : vector<32x128xi1> to vector<32x128xi32>
    %72 = arith.sitofp %71 : vector<32x128xi32> to vector<32x128xf32>
    %c0_47 = arith.constant 0 : index
    %c0_48 = arith.constant 0 : index
    %c0_49 = arith.constant 0 : index
    %c0_50 = arith.constant 0 : index
    %73 = vector.load %arg6[%c0_47, %c0_48, %c0_49, %c0_50] : memref<1x1x1x1xf32, #tpu.memory_space<vmem>>, vector<1x1x1x1xf32>
    %74 = arith.addf %65, %72 : vector<32x128xf32>
    %75 = vector.shape_cast %74 : vector<32x128xf32> to vector<1x32x128xf32>
    %cst_51 = arith.constant dense<0.000000e+00> : vector<1xf32>
    %76 = vector.multi_reduction <add>, %75, %cst_51 [1, 2] : vector<1x32x128xf32> to vector<1xf32>
    %77 = vector.shape_cast %76 : vector<1xf32> to vector<1x1x1xf32>
    %78 = vector.extract %77[0, 0, 0] : f32 from vector<1x1x1xf32>
    %79 = vector.broadcast %78 : f32 to vector<1x1x1x1xf32>
    %80 = arith.addf %73, %79 : vector<1x1x1x1xf32>
    %c0_52 = arith.constant 0 : index
    %c0_53 = arith.constant 0 : index
    %c0_54 = arith.constant 0 : index
    %c0_55 = arith.constant 0 : index
    %81 = vector.load %arg6[%c0_52, %c0_53, %c0_54, %c0_55] : memref<1x1x1x1xf32, #tpu.memory_space<vmem>>, vector<1x1x1x1xf32>
    tpu.vector_store %arg6[%c0_52, %c0_53, %c0_54, %c0_55], %80 {strides = array<i32>} : memref<1x1x1x1xf32, #tpu.memory_space<vmem>>, vector<1x1x1x1xf32>,
    return
  }
  func.func @transform_0(%arg0: i32, %arg1: i32, %arg2: i32) -> (i32, i32, i32, i32) {
    %c1_i32 = arith.constant 1 : i32
    %0 = arith.muli %arg1, %c1_i32 : i32
    %1 = arith.addi %0, %arg2 : i32
    %c0_i32 = arith.constant 0 : i32
    %c0_i32_0 = arith.constant 0 : i32
    %c0_i32_1 = arith.constant 0 : i32
    return %arg0, %c0_i32, %1, %c0_i32_0 : i32, i32, i32, i32
  }
  func.func @transform_1(%arg0: i32, %arg1: i32, %arg2: i32) -> (i32, i32, i32, i32) {
    %c1_i32 = arith.constant 1 : i32
    %0 = arith.muli %arg1, %c1_i32 : i32
    %1 = arith.addi %0, %arg2 : i32
    %c0_i32 = arith.constant 0 : i32
    %c0_i32_0 = arith.constant 0 : i32
    %c0_i32_1 = arith.constant 0 : i32
    return %arg0, %c0_i32, %1, %c0_i32_0 : i32, i32, i32, i32
  }
  func.func @transform_2(%arg0: i32, %arg1: i32, %arg2: i32) -> (i32, i32, i32, i32) {
    %c0_i32 = arith.constant 0 : i32
    %c0_i32_0 = arith.constant 0 : i32
    %c0_i32_1 = arith.constant 0 : i32
    return %arg0, %arg1, %c0_i32, %c0_i32_0 : i32, i32, i32, i32
  }
  func.func @transform_3(%arg0: i32, %arg1: i32, %arg2: i32) -> (i32, i32, i32, i32) {
    %c0_i32 = arith.constant 0 : i32
    %c0_i32_0 = arith.constant 0 : i32
    %c0_i32_1 = arith.constant 0 : i32
    return %arg0, %arg1, %c0_i32, %c0_i32_0 : i32, i32, i32, i32
  }
}

</mosaic_0001>

<llo_original>
// kernel: dice_loss.1
$region0: #{dice_loss.1}
  #allocation0 [shape = 'u32[]', space=smem, size = 0x4, offset = 0x4, fixed_abs, tag = 'smem constant byte address 0x4 - core index']
  #allocation1 [shape = 'u32[144,128]{1,0:T(1,128)}', space=vmem, size = 0x12000, scoped, tag = 'internal scratch']
  %s0 = inlined_call_operand.vmem [shape: f32[2,4,32,128], index: 0, kind: input, shape index: {}]
  %s1 = inlined_call_operand.vmem [shape: s8[2,1,32,128], index: 1, kind: input, shape index: {}]
  %s2 = inlined_call_operand.vmem [shape: f32[2,1,1,1], index: 2, kind: output, shape index: {0}]
  %s3 = inlined_call_operand.vmem [shape: f32[2,1,1,1], index: 3, kind: output, shape index: {1}]
  %4 = xla_tuple %s2, %s3
  %s5 = sld [smem:[#allocation0]]
  $region53: #{dice_loss.1} parent=0
    _
  %s7 = ssub.s32 1, %s5
  %s8 = scalar_select 0, %s7, %s5
  loop: start=0, step=1, limit=4
  $region2: #{dice_loss.1} parent=0 // loop_pre_header
    _
  $region3: #{dice_loss.1} parent=0 // loop_header
    %s10 = sphi 0, %s14
    %p11 = scmp.ge.s32.totalorder %s10, 4
    %s17 = sphi 0, %s36
    %s18 = sphi 0, %s32
    %s19 = sphi 0, %s28
    %s20 = sphi 0, %s17
    %s21 = sphi 0, %s18
    %s22 = sphi 0, %s19
    %s23 = sphi 0, %s20
    %s24 = sphi 0, %s21
    %s25 = sphi 0, %s22
    %s43 = sphi 0, %s45
    %s46 = sphi 0, %s43
    %s47 = sphi 0, %s46
    %s63 = sphi 0, %s47
    %s73 = sphi 0, %s75
    %s76 = sphi 0, %s73
    %s77 = sphi 0, %s76
    %s93 = sphi 0, %s77
    %s101 = sphi 0, %s103
    %s104 = sphi 0, %s101
    %s105 = sphi 0, %s104
    %s121 = sphi 0, %s105
    %s129 = sphi 0, %s131
    %s132 = sphi 0, %s129
    %s133 = sphi 0, %s132
    %s149 = sphi 0, %s133
  $region4: #{dice_loss.1} parent=0 // loop_header_branch
    %13 = sbr.rel (%p11) target = $region8
  $region5: #{dice_loss.1} parent=0 // loop_body
    %s15 = ssub.s32 %s10, 1
    %s16 = ssub.s32 %s10, 2
    %s26 = sadd.s32 1, %s19
    %p27 = scmp.ge.s32.totalorder %s26, 1
    %s28 = scalar_select %p27, 0, %s26
    %s29 = sadd.s32 1, %s18
    %s30 = scalar_select %p27, %s29, %s18
    %p31 = scmp.ge.s32.totalorder %s30, 1
    %s32 = scalar_select %p31, 0, %s30
    %s33 = sadd.s32 1, %s17
    %s34 = scalar_select %p31, %s33, %s17
    %p35 = scmp.ge.s32.totalorder %s34, 2
    %s36 = scalar_select %p35, 0, %s34
    %s37 = sadd.s32 %s18, %s19
    %s38 = sadd.s32 %s32, %s28
    %s39 = ssub.s32 %s17, %s36
    %s40 = ssub.s32 %s37, %s38
    %s41 = sor.u32 %s39, %s40
    %p42 = scmp.eq.s32.totalorder %s41, 0
    %s44 = sadd.s32 %s43, 1
    %s45 = scalar_select %p42, %s43, %s44
    %p48 = pneg %p42
    %p49 = scmp.eq.s32.totalorder %s10, 1
    %p50 = por %p48, %p49
    %p51 = scmp.ne.s32.totalorder %s43, %s46
    %p52 = scmp.eq.s32.totalorder %s10, 0
    %p53 = por %p51, %p52
    %p54 = scmp.ne.s32.totalorder %s43, %s46
    %p55 = scmp.eq.s32.totalorder %s15, 1
    %p56 = por %p54, %p55
    %p57 = scmp.ne.s32.totalorder %s46, %s47
    %p58 = scmp.eq.s32.totalorder %s15, 0
    %p59 = por %p57, %p58
    %p60 = scmp.ne.s32.totalorder %s46, %s47
    %p61 = scmp.eq.s32.totalorder %s16, 1
    %p62 = por %p60, %p61
    %p64 = scmp.ne.s32.totalorder %s47, %s63
    %p65 = scmp.eq.s32.totalorder %s16, 0
    %p66 = por %p64, %p65
    %s67 = sadd.s32 %s18, %s19
    %s68 = sadd.s32 %s32, %s28
    %s69 = ssub.s32 %s17, %s36
    %s70 = ssub.s32 %s67, %s68
    %s71 = sor.u32 %s69, %s70
    %p72 = scmp.eq.s32.totalorder %s71, 0
    %s74 = sadd.s32 %s73, 1
    %s75 = scalar_select %p72, %s73, %s74
    %p78 = pneg %p72
    %p79 = scmp.eq.s32.totalorder %s10, 1
    %p80 = por %p78, %p79
    %p81 = scmp.ne.s32.totalorder %s73, %s76
    %p82 = scmp.eq.s32.totalorder %s10, 0
    %p83 = por %p81, %p82
    %p84 = scmp.ne.s32.totalorder %s73, %s76
    %p85 = scmp.eq.s32.totalorder %s15, 1
    %p86 = por %p84, %p85
    %p87 = scmp.ne.s32.totalorder %s76, %s77
    %p88 = scmp.eq.s32.totalorder %s15, 0
    %p89 = por %p87, %p88
    %p90 = scmp.ne.s32.totalorder %s76, %s77
    %p91 = scmp.eq.s32.totalorder %s16, 1
    %p92 = por %p90, %p91
    %p94 = scmp.ne.s32.totalorder %s77, %s93
    %p95 = scmp.eq.s32.totalorder %s16, 0
    %p96 = por %p94, %p95
    %s97 = ssub.s32 %s17, %s36
    %s98 = ssub.s32 %s18, %s32
    %s99 = sor.u32 %s97, %s98
    %p100 = scmp.eq.s32.totalorder %s99, 0
    %s102 = sadd.s32 %s101, 1
    %s103 = scalar_select %p100, %s101, %s102
    %p106 = pneg %p100
    %p107 = scmp.eq.s32.totalorder %s10, 1
    %p108 = por %p106, %p107
    %p109 = scmp.ne.s32.totalorder %s101, %s104
    %p110 = scmp.eq.s32.totalorder %s10, 0
    %p111 = por %p109, %p110
    %p112 = scmp.ne.s32.totalorder %s101, %s104
    %p113 = scmp.eq.s32.totalorder %s15, 1
    %p114 = por %p112, %p113
    %p115 = scmp.ne.s32.totalorder %s104, %s105
    %p116 = scmp.eq.s32.totalorder %s15, 0
    %p117 = por %p115, %p116
    %p118 = scmp.ne.s32.totalorder %s104, %s105
    %p119 = scmp.eq.s32.totalorder %s16, 1
    %p120 = por %p118, %p119
    %p122 = scmp.ne.s32.totalorder %s105, %s121
    %p123 = scmp.eq.s32.totalorder %s16, 0
    %p124 = por %p122, %p123
    %s125 = ssub.s32 %s17, %s36
    %s126 = ssub.s32 %s18, %s32
    %s127 = sor.u32 %s125, %s126
    %p128 = scmp.eq.s32.totalorder %s127, 0
    %s130 = sadd.s32 %s129, 1
    %s131 = scalar_select %p128, %s129, %s130
    %p134 = pneg %p128
    %p135 = scmp.eq.s32.totalorder %s10, 1
    %p136 = por %p134, %p135
    %p137 = scmp.ne.s32.totalorder %s129, %s132
    %p138 = scmp.eq.s32.totalorder %s10, 0
    %p139 = por %p137, %p138
    %p140 = scmp.ne.s32.totalorder %s129, %s132
    %p141 = scmp.eq.s32.totalorder %s15, 1
    %p142 = por %p140, %p141
    %p143 = scmp.ne.s32.totalorder %s132, %s133
    %p144 = scmp.eq.s32.totalorder %s15, 0
    %p145 = por %p143, %p144
    %p146 = scmp.ne.s32.totalorder %s132, %s133
    %p147 = scmp.eq.s32.totalorder %s16, 1
    %p148 = por %p146, %p147
    %p150 = scmp.ne.s32.totalorder %s133, %s149
    %p151 = scmp.eq.s32.totalorder %s16, 0
    %p152 = por %p150, %p151
    %p153 = scmp.le.s32.totalorder 1, %s10
    %p154 = scmp.lt.s32.totalorder %s10, 3
    %p155 = pnand %p153, %p154
    %p156 = pneg %p155
    // Predicated region
    $region9: #{dice_loss.1} parent=5 // pred_check
      _
    $region10: #{dice_loss.1} parent=5 // pred_check_branch
      %158 = sbr.rel (%p155) target = $region12
    $region11: #{dice_loss.1} parent=5 // pred_region
      %s159 = ssub.s32 %s10, 1
    $region12: #{dice_loss.1} parent=5 // pred_fallthru
      _
    %p160 = scmp.lt.s32.totalorder %s10, 2
    // Predicated region
    $region13: #{dice_loss.1} parent=5 // pred_check
      %p161 = pneg %p160
    $region14: #{dice_loss.1} parent=5 // pred_check_branch
      %163 = sbr.rel (%p161) target = $region16
    $region15: #{dice_loss.1} parent=5 // pred_region
      // Predicated region
      $region17: #{dice_loss.1} parent=15 // pred_check
        %p164 = pneg %p53
      $region18: #{dice_loss.1} parent=15 // pred_check_branch
        %166 = sbr.rel (%p164) target = $region20
      $region19: #{dice_loss.1} parent=15 // pred_region
        %s167 = sadd.s32 %s18, %s19
        %s168 = smul.u32 4, %s167
        %p169 = scmp.lt.s32.totalorder %s17, 1
        %s170 = scalar_select %p169, %s17, 1
        %p171 = scmp.lt.s32.totalorder %s168, 3
        %s172 = scalar_select %p171, %s168, 3
        %s173 = smul.addr %s170, 16
        %s174 = sadd.s32 %s172, %s173
        %s175 = smul.addr %s174, 8
        %s176 = scalar_lea.vmem %s0, %s175
        %s177 = sadd.s32 %s18, %s19
        %s178 = smul.u32 4, %s177
      $region20: #{dice_loss.1} parent=15 // pred_fallthru
        _
      // Predicated region
      $region21: #{dice_loss.1} parent=15 // pred_check
        %p179 = pneg %p83
      $region22: #{dice_loss.1} parent=15 // pred_check_branch
        %181 = sbr.rel (%p179) target = $region24
      $region23: #{dice_loss.1} parent=15 // pred_region
        %s182 = sadd.s32 %s18, %s19
        %p183 = scmp.lt.s32.totalorder %s17, 1
        %s184 = scalar_select %p183, %s17, 1
        %p185 = scmp.lt.s32.totalorder %s182, 0
        %s186 = scalar_select %p185, %s182, 0
        %s187 = sadd.s32 %s186, %s184
        %s188 = smul.addr %s187, 8
        %s189 = scalar_lea.vmem %s1, %s188
        %s190 = sadd.s32 %s18, %s19
      $region24: #{dice_loss.1} parent=15 // pred_fallthru
        _
    $region16: #{dice_loss.1} parent=5 // pred_fallthru
      _
    %p191 = scmp.le.s32.totalorder 1, %s10
    %p192 = scmp.lt.s32.totalorder %s10, 3
    %p193 = pnand %p191, %p192
    %p194 = pneg %p193
    // Predicated region
    $region25: #{dice_loss.1} parent=5 // pred_check
      _
    $region26: #{dice_loss.1} parent=5 // pred_check_branch
      %196 = sbr.rel (%p193) target = $region28
    $region27: #{dice_loss.1} parent=5 // pred_region
      %s197 = ssub.s32 %s10, 1
      %s198 = sadd.s32 %s21, %s22
      %s199 = smul.u32 4, %s198
      %p200 = scmp.lt.s32.totalorder %s20, 1
      %s201 = scalar_select %p200, %s20, 1
      %p202 = scmp.lt.s32.totalorder %s199, 3
      %s203 = scalar_select %p202, %s199, 3
      %s204 = smul.addr %s201, 16
      %s205 = sadd.s32 %s203, %s204
      %s206 = smul.addr %s205, 8
      %s207 = scalar_lea.vmem %s0, %s206
      %p208 = pneg %p59
      %p209 = pneg %p56
      %s210 = sadd.s32 %s21, %s22
      %p211 = scmp.lt.s32.totalorder %s20, 1
      %s212 = scalar_select %p211, %s20, 1
      %p213 = scmp.lt.s32.totalorder %s210, 0
      %s214 = scalar_select %p213, %s210, 0
      %s215 = sadd.s32 %s214, %s212
      %s216 = smul.addr %s215, 8
      %s217 = scalar_lea.vmem %s1, %s216
      %p218 = pneg %p89
      %p219 = pneg %p86
      %p220 = pneg %p117
      %p221 = pneg %p114
      %p222 = scmp.lt.s32.totalorder %s20, 1
      %s223 = scalar_select %p222, %s20, 1
      %p224 = scmp.lt.s32.totalorder %s21, 0
      %s225 = scalar_select %p224, %s21, 0
      %s226 = sadd.s32 %s225, %s223
      %s227 = scalar_lea.vmem %s2, %s226
      %p228 = pneg %p145
      %p229 = pneg %p142
      %p230 = scmp.lt.s32.totalorder %s20, 1
      %s231 = scalar_select %p230, %s20, 1
      %p232 = scmp.lt.s32.totalorder %s21, 0
      %s233 = scalar_select %p232, %s21, 0
      %s234 = sadd.s32 %s233, %s231
      %s235 = scalar_lea.vmem %s3, %s234
      %s236 = sadd.s32 %s21, %s22
      %s237 = smul.u32 4, %s236
      %p238 = scmp.lt.s32.totalorder %s20, 1
      %s239 = scalar_select %p238, %s20, 1
      %p240 = scmp.lt.s32.totalorder %s237, 3
      %s241 = scalar_select %p240, %s237, 3
      %s242 = smul.addr %s239, 16
      %s243 = sadd.s32 %s241, %s242
      %s244 = smul.addr %s243, 8
      %s245 = scalar_lea.vmem %s0, %s244
      %s246 = sadd.s32 %s21, %s22
      %s247 = smul.u32 4, %s246
      %s248 = sadd.s32 %s21, %s22
      %p249 = scmp.lt.s32.totalorder %s20, 1
      %s250 = scalar_select %p249, %s20, 1
      %p251 = scmp.lt.s32.totalorder %s248, 0
      %s252 = scalar_select %p251, %s248, 0
      %s253 = sadd.s32 %s252, %s250
      %s254 = smul.addr %s253, 8
      %s255 = scalar_lea.vmem %s1, %s254
      %s256 = sadd.s32 %s21, %s22
      %p257 = scmp.lt.s32.totalorder %s20, 1
      %s258 = scalar_select %p257, %s20, 1
      %p259 = scmp.lt.s32.totalorder %s21, 0
      %s260 = scalar_select %p259, %s21, 0
      %s261 = sadd.s32 %s260, %s258
      %s262 = scalar_lea.vmem %s2, %s261
      %p263 = scmp.lt.s32.totalorder %s20, 1
      %s264 = scalar_select %p263, %s20, 1
      %p265 = scmp.lt.s32.totalorder %s21, 0
      %s266 = scalar_select %p265, %s21, 0
      %s267 = sadd.s32 %s266, %s264
      %s268 = scalar_lea.vmem %s3, %s267
      %p269 = scmp.eq.s32.totalorder %s22, 0
      // Predicated region
      $region29: #{dice_loss.1} parent=27 // pred_check
        %p270 = pneg %p269
      $region30: #{dice_loss.1} parent=27 // pred_check_branch
        %272 = sbr.rel (%p270) target = $region32
      $region31: #{dice_loss.1} parent=27 // pred_region
        %vm273 = vcmask 0
        %274 = vst.msk [vmem:[%s262] sm:$0x1] %vm273, 0.0
        %275 = vst.msk [vmem:[%s268] sm:$0x1] %vm273, 0.0
      $region32: #{dice_loss.1} parent=27 // pred_fallthru
        _
      %v276 = vld [vmem:[%s255] sm:$0xff]
      %v277 = vunpack.c.0.s8 %v276
      %v278 = vunpack.c.1.s8 %v276
      %v279 = vunpack.c.2.s8 %v276
      %v280 = vunpack.c.3.s8 %v276
      %v281 = vld [vmem:[%s245] sm:$0xff]
      %v282 = vld [vmem:[%s245 + $0x8] sm:$0xff]
      %v283 = vld [vmem:[%s245 + $0x10] sm:$0xff]
      %v284 = vld [vmem:[%s245 + $0x18] sm:$0xff]
      %s285 = scalar_lea.vmem %s245, 32
      %v286 = vld [vmem:[%s285] sm:$0xff]
      %v287 = vld [vmem:[%s285 + $0x8] sm:$0xff]
      %v288 = vld [vmem:[%s285 + $0x10] sm:$0xff]
      %v289 = vld [vmem:[%s285 + $0x18] sm:$0xff]
      %v290 = vmax.f32 %v281, %v286
      %v291 = vmax.f32 %v282, %v287
      %v292 = vmax.f32 %v283, %v288
      %v293 = vmax.f32 %v284, %v289
      %s294 = scalar_lea.vmem %s245, 64
      %v295 = vld [vmem:[%s294] sm:$0xff]
      %v296 = vld [vmem:[%s294 + $0x8] sm:$0xff]
      %v297 = vld [vmem:[%s294 + $0x10] sm:$0xff]
      %v298 = vld [vmem:[%s294 + $0x18] sm:$0xff]
      %v299 = vmax.f32 %v290, %v295
      %v300 = vmax.f32 %v291, %v296
      %v301 = vmax.f32 %v292, %v297
      %v302 = vmax.f32 %v293, %v298
      %s303 = scalar_lea.vmem %s245, 96
      %v304 = vld [vmem:[%s303] sm:$0xff]
      %v305 = vld [vmem:[%s303 + $0x8] sm:$0xff]
      %v306 = vld [vmem:[%s303 + $0x10] sm:$0xff]
      %v307 = vld [vmem:[%s303 + $0x18] sm:$0xff]
      %v308 = vmax.f32 %v299, %v304
      %v309 = vmax.f32 %v300, %v305
      %v310 = vmax.f32 %v301, %v306
      %v311 = vmax.f32 %v302, %v307
      %v312 = vsub.f32 %v281, %v308
      %v313 = vsub.f32 %v282, %v309
      %v314 = vsub.f32 %v283, %v310
      %v315 = vsub.f32 %v284, %v311
      %v316 = vmul.f32 %v312, 1.442695
      %v317 = vpow.pop %v316
      %v318 = vmul.f32 %v313, 1.442695
      %v319 = vpow.pop %v318
      %v320 = vmul.f32 %v314, 1.442695
      %v321 = vpow.pop %v320
      %v322 = vmul.f32 %v315, 1.442695
      %v323 = vpow.pop %v322
      %v324 = vadd.f32 %v317, 0.0
      %v325 = vadd.f32 %v319, 0.0
      %v326 = vadd.f32 %v321, 0.0
      %v327 = vadd.f32 %v323, 0.0
      %vm328 = vcmp.eq.s32.totalorder %v277, 0
      %vm329 = vcmp.eq.s32.totalorder %v278, 0
      %vm330 = vcmp.eq.s32.totalorder %v279, 0
      %vm331 = vcmp.eq.s32.totalorder %v280, 0
      %v332 = vsel %vm328, %v317, 0.0
      %v333 = vsel %vm329, %v319, 0.0
      %v334 = vsel %vm330, %v321, 0.0
      %v335 = vsel %vm331, %v323, 0.0
      %v336 = vsub.f32 %v286, %v308
      %v337 = vsub.f32 %v287, %v309
      %v338 = vsub.f32 %v288, %v310
      %v339 = vsub.f32 %v289, %v311
      %v340 = vmul.f32 %v336, 1.442695
      %v341 = vpow.pop %v340
      %v342 = vmul.f32 %v337, 1.442695
      %v343 = vpow.pop %v342
      %v344 = vmul.f32 %v338, 1.442695
      %v345 = vpow.pop %v344
      %v346 = vmul.f32 %v339, 1.442695
      %v347 = vpow.pop %v346
      %v348 = vadd.f32 %v324, %v341
      %v349 = vadd.f32 %v325, %v343
      %v350 = vadd.f32 %v326, %v345
      %v351 = vadd.f32 %v327, %v347
      %vm352 = vcmp.eq.s32.totalorder %v277, 1
      %vm353 = vcmp.eq.s32.totalorder %v278, 1
      %vm354 = vcmp.eq.s32.totalorder %v279, 1
      %vm355 = vcmp.eq.s32.totalorder %v280, 1
      %v356 = vsel %vm352, %v341, %v332
      %v357 = vsel %vm353, %v343, %v333
      %v358 = vsel %vm354, %v345, %v334
      %v359 = vsel %vm355, %v347, %v335
      %v360 = vsub.f32 %v295, %v308
      %v361 = vsub.f32 %v296, %v309
      %v362 = vsub.f32 %v297, %v310
      %v363 = vsub.f32 %v298, %v311
      %v364 = vmul.f32 %v360, 1.442695
      %v365 = vpow.pop %v364
      %v366 = vmul.f32 %v361, 1.442695
      %v367 = vpow.pop %v366
      %v368 = vmul.f32 %v362, 1.442695
      %v369 = vpow.pop %v368
      %v370 = vmul.f32 %v363, 1.442695
      %v371 = vpow.pop %v370
      %v372 = vadd.f32 %v348, %v365
      %v373 = vadd.f32 %v349, %v367
      %v374 = vadd.f32 %v350, %v369
      %v375 = vadd.f32 %v351, %v371
      %vm376 = vcmp.eq.s32.totalorder %v277, 2
      %vm377 = vcmp.eq.s32.totalorder %v278, 2
      %vm378 = vcmp.eq.s32.totalorder %v279, 2
      %vm379 = vcmp.eq.s32.totalorder %v280, 2
      %v380 = vsel %vm376, %v365, %v356
      %v381 = vsel %vm377, %v367, %v357
      %v382 = vsel %vm378, %v369, %v358
      %v383 = vsel %vm379, %v371, %v359
      %v384 = vsub.f32 %v304, %v308
      %v385 = vsub.f32 %v305, %v309
      %v386 = vsub.f32 %v306, %v310
      %v387 = vsub.f32 %v307, %v311
      %v388 = vmul.f32 %v384, 1.442695
      %v389 = vpow.pop %v388
      %v390 = vmul.f32 %v385, 1.442695
      %v391 = vpow.pop %v390
      %v392 = vmul.f32 %v386, 1.442695
      %v393 = vpow.pop %v392
      %v394 = vmul.f32 %v387, 1.442695
      %v395 = vpow.pop %v394
      %v396 = vadd.f32 %v372, %v389
      %v397 = vadd.f32 %v373, %v391
      %v398 = vadd.f32 %v374, %v393
      %v399 = vadd.f32 %v375, %v395
      %vm400 = vcmp.eq.s32.totalorder %v277, 3
      %vm401 = vcmp.eq.s32.totalorder %v278, 3
      %vm402 = vcmp.eq.s32.totalorder %v279, 3
      %vm403 = vcmp.eq.s32.totalorder %v280, 3
      %v404 = vsel %vm400, %v389, %v380
      %v405 = vsel %vm401, %v391, %v381
      %v406 = vsel %vm402, %v393, %v382
      %v407 = vsel %vm403, %v395, %v383
      %v408 = vld [vmem:[%s262] sm:$0x1]
      %v409 = vrcp.pop %v396
      %v410 = vmul.f32 1.0, %v409
      %v411 = vrcp.pop %v397
      %v412 = vmul.f32 1.0, %v411
      %v413 = vrcp.pop %v398
      %v414 = vmul.f32 1.0, %v413
      %v415 = vrcp.pop %v399
      %v416 = vmul.f32 1.0, %v415
      %v417 = vmul.f32 %v404, %v410
      %v418 = vmul.f32 %v405, %v412
      %v419 = vmul.f32 %v406, %v414
      %v420 = vmul.f32 %v407, %v416
      %v421 = vadd.f32 %v417, %v418
      %v422 = vadd.f32 %v421, %v419
      %v423 = vadd.f32 %v422, %v420
      %424 = vadd.xlane.f32.xlu0 %v423
      %v425 = vpop.xlane.xlu0 %424
      %v426 = vrot.slane %v425, 4
      %v427 = vadd.f32 %v425, %v426
      %v428 = vrot.slane %v427, 2
      %v429 = vadd.f32 %v427, %v428
      %v430 = vrot.slane %v429, 1
      %v431 = vadd.f32 %v429, %v430
      %s432 = vtos %v431
      %v433 = vstv %s432
      %v434 = vadd.f32 %v408, %v433
      %vm435 = vcmask 0
      %436 = vst.msk [vmem:[%s262] sm:$0x1] %vm435, %v434
      %vm437 = vcmp.ge.s32.totalorder %v277, 0
      %vm438 = vcmp.ge.s32.totalorder %v278, 0
      %vm439 = vcmp.ge.s32.totalorder %v279, 0
      %vm440 = vcmp.ge.s32.totalorder %v280, 0
      %v441 = vsel %vm437, 1, 0
      %v442 = vsel %vm438, 1, 0
      %v443 = vsel %vm439, 1, 0
      %v444 = vsel %vm440, 1, 0
      %v445 = vcvt.s32.f32 %v441
      %v446 = vcvt.s32.f32 %v442
      %v447 = vcvt.s32.f32 %v443
      %v448 = vcvt.s32.f32 %v444
      %vm449 = vcmp.lt.s32.totalorder %v277, 4
      %vm450 = vcmp.lt.s32.totalorder %v278, 4
      %vm451 = vcmp.lt.s32.totalorder %v279, 4
      %vm452 = vcmp.lt.s32.totalorder %v280, 4
      %vm453 = vmand %vm437, %vm449
      %vm454 = vmand %vm438, %vm450
      %vm455 = vmand %vm439, %vm451
      %vm456 = vmand %vm440, %vm452
      %v457 = vsel %vm453, 1, 0
      %v458 = vsel %vm454, 1, 0
      %v459 = vsel %vm455, 1, 0
      %v460 = vsel %vm456, 1, 0
      %v461 = vcvt.s32.f32 %v457
      %v462 = vcvt.s32.f32 %v458
      %v463 = vcvt.s32.f32 %v459
      %v464 = vcvt.s32.f32 %v460
      %v465 = vld [vmem:[%s268] sm:$0x1]
      %v466 = vadd.f32 %v445, %v461
      %v467 = vadd.f32 %v446, %v462
      %v468 = vadd.f32 %v447, %v463
      %v469 = vadd.f32 %v448, %v464
      %v470 = vadd.f32 %v466, %v467
      %v471 = vadd.f32 %v470, %v468
      %v472 = vadd.f32 %v471, %v469
      %473 = vadd.xlane.f32.xlu0 %v472
      %v474 = vpop.xlane.xlu0 %473
      %v475 = vrot.slane %v474, 4
      %v476 = vadd.f32 %v474, %v475
      %v477 = vrot.slane %v476, 2
      %v478 = vadd.f32 %v476, %v477
      %v479 = vrot.slane %v478, 1
      %v480 = vadd.f32 %v478, %v479
      %s481 = vtos %v480
      %v482 = vstv %s481
      %v483 = vadd.f32 %v465, %v482
      %484 = vst.msk [vmem:[%s268] sm:$0x1] %vm435, %v483
      %p485 = scmp.lt.s32.totalorder %s20, 1
      %s486 = scalar_select %p485, %s20, 1
      %p487 = scmp.lt.s32.totalorder %s21, 0
      %s488 = scalar_select %p487, %s21, 0
      %s489 = sadd.s32 %s488, %s486
      %s490 = scalar_lea.vmem %s2, %s489
      %p491 = scmp.lt.s32.totalorder %s20, 1
      %s492 = scalar_select %p491, %s20, 1
      %p493 = scmp.lt.s32.totalorder %s21, 0
      %s494 = scalar_select %p493, %s21, 0
      %s495 = sadd.s32 %s494, %s492
      %s496 = scalar_lea.vmem %s3, %s495
      // Predicated region
      $region33: #{dice_loss.1} parent=27 // pred_check
        %p497 = pneg %p114
      $region34: #{dice_loss.1} parent=27 // pred_check_branch
        %499 = sbr.rel (%p497) target = $region36
      $region35: #{dice_loss.1} parent=27 // pred_region
        _
      $region36: #{dice_loss.1} parent=27 // pred_fallthru
        _
      // Predicated region
      $region37: #{dice_loss.1} parent=27 // pred_check
        %p500 = pneg %p142
      $region38: #{dice_loss.1} parent=27 // pred_check_branch
        %502 = sbr.rel (%p500) target = $region40
      $region39: #{dice_loss.1} parent=27 // pred_region
        _
      $region40: #{dice_loss.1} parent=27 // pred_fallthru
        _
    $region28: #{dice_loss.1} parent=5 // pred_fallthru
      _
    %p503 = scmp.le.s32.totalorder 2, %s10
    // Predicated region
    $region41: #{dice_loss.1} parent=5 // pred_check
      %p504 = pneg %p503
    $region42: #{dice_loss.1} parent=5 // pred_check_branch
      %506 = sbr.rel (%p504) target = $region44
    $region43: #{dice_loss.1} parent=5 // pred_region
      %s507 = ssub.s32 %s10, 2
      // Predicated region
      $region45: #{dice_loss.1} parent=43 // pred_check
        %p508 = pneg %p120
      $region46: #{dice_loss.1} parent=43 // pred_check_branch
        %510 = sbr.rel (%p508) target = $region48
      $region47: #{dice_loss.1} parent=43 // pred_region
        %p511 = scmp.lt.s32.totalorder %s23, 1
        %s512 = scalar_select %p511, %s23, 1
        %p513 = scmp.lt.s32.totalorder %s24, 0
        %s514 = scalar_select %p513, %s24, 0
        %s515 = sadd.s32 %s514, %s512
        %s516 = scalar_lea.vmem %s2, %s515
      $region48: #{dice_loss.1} parent=43 // pred_fallthru
        _
      // Predicated region
      $region49: #{dice_loss.1} parent=43 // pred_check
        %p517 = pneg %p148
      $region50: #{dice_loss.1} parent=43 // pred_check_branch
        %519 = sbr.rel (%p517) target = $region52
      $region51: #{dice_loss.1} parent=43 // pred_region
        %p520 = scmp.lt.s32.totalorder %s23, 1
        %s521 = scalar_select %p520, %s23, 1
        %p522 = scmp.lt.s32.totalorder %s24, 0
        %s523 = scalar_select %p522, %s24, 0
        %s524 = sadd.s32 %s523, %s521
        %s525 = scalar_lea.vmem %s3, %s524
      $region52: #{dice_loss.1} parent=43 // pred_fallthru
        _
    $region44: #{dice_loss.1} parent=5 // pred_fallthru
      _
  $region6: #{dice_loss.1} parent=0 // loop_footer
    %s14 = sadd.s32 1, %s10
  $region7: #{dice_loss.1} parent=0 // loop_footer_branch
    %9 = sbr.rel target = $region3
  $region8: #{dice_loss.1} parent=0 // loop_exit
    _

</llo_original>
